<compile_context>
chip_gen: v7x
topology: tpu7x:2x2x1
jax: 0.10.0
libtpu: 0.0.40
codegen_flags: <defaults>
</compile_context>

<pallas_src>
import functools

import jax
import jax.numpy as jnp
from jax.experimental import pallas as pl
from jax.experimental.pallas import tpu as pltpu

_LANES = 128


def _round_up(x, m):
    return (x + m - 1) // m * m


def _largest_divisor(n, cap):
    cap = max(1, min(n, cap))
    for t in range(cap, 0, -1):
        if n % t == 0:
            return t
    return 1


def _largest_divisor_mult8(n, cap):
    cap = max(8, min(n, cap))
    for t in range(cap - cap % 8, 0, -8):
        if n % t == 0:
            return t
    return None


def _vmem_capacity_bytes():
    """Per-core VMEM capacity (128 MiB v5e/v6e, 64 MiB v7x)."""
    try:
        return int(pltpu.get_tpu_info().vmem_capacity_bytes)
    except Exception:
        return 64 * 1024 * 1024  # conservative default (v7x per-TC)


def _choose_row_tile(N, adj_itemsize, vmem_cap, max_row_tile):
    """Pick the adj row-slab height (TILE_N) and padded N."""
    # ~40% of VMEM for the double-buffered adj row slab: ~48-51 MiB on
    # 128 MiB parts (TILE_N reaches 512 where N allows), ~25 MiB on v7x.
    adj_budget = max(8 * 1024 * 1024, int(vmem_cap * 0.4))
    row_cap = 512 if max_row_tile is None else max_row_tile
    rows_by_vmem = max(8, adj_budget // max(1, 2 * N * adj_itemsize))
    row_cap = max(8, min(row_cap, rows_by_vmem))
    if N <= row_cap:
        return N, N
    t = _largest_divisor_mult8(N, row_cap)
    if t is not None:
        return t, N
    # No usable divisor: pad N so the row slab stays bounded (never fall back
    # to an O(N^2) adj block that can blow the scoped VMEM limit).
    t = max(8, (row_cap // 8) * 8)
    return t, _round_up(N, t)


def _choose_batch_tile(B, N, tile_n, n_row_tiles):
    """Pack small graphs so each grid step feeds the MXU/store path ~1024 rows,
    while keeping >= 2 grid steps so a 2-TC part (v7x) can shard the grid."""
    if tile_n != N or B <= 1 or N >= 1024:
        return 1
    cap = max(1, 1024 // N)
    if n_row_tiles == 1:
        cap = min(cap, max(1, B // 2))   # keep outer grid axis >= 2
    return _largest_divisor(B, cap)


def _mxu_cost(m, k, n, tile=256):
    """MXU occupancy model: rows streamed x K-tiles x output-lane tiles."""
    return m * (-(-k // tile)) * (-(-n // tile))


def _gc_fused_kernel(adj_ref, x_ref, w_ref, *rest, add_self, use_bias,
                     normalize_embedding, tile_n):
    """y = (adj @ x [+ x_rows]) @ W [+ b]  [, L2-normalize over last dim]."""
    if use_bias:
        b_ref, o_ref = rest
    else:
        (o_ref,) = rest

    bt, tn, n = adj_ref.shape
    din = x_ref.shape[-1]
    dp = w_ref.shape[-1]

    adj = adj_ref[...]          # already in compute dtype (wrapper-side cast)
    x_all = x_ref[...]
    w = w_ref[...]

    y0 = jnp.einsum("brn,bnd->brd", adj, x_all,
                    preferred_element_type=jnp.float32)          # (BT,TN,Din)
    if add_self:
        if tile_n == n:
            x_rows = x_all
        else:
            r0 = pl.multiple_of(pl.program_id(1) * tile_n, tile_n)
            x_rows = x_ref[:, pl.ds(r0, tile_n), :]
        y0 = y0 + x_rows.astype(jnp.float32)

    # Fold batch into rows so the @W step is one big MXU matmul.
    y = jnp.dot(y0.reshape(bt * tn, din).astype(w.dtype), w,
                preferred_element_type=jnp.float32).reshape(bt, tn, dp)

    if use_bias:
        y = y + b_ref[...].astype(jnp.float32).reshape(1, 1, dp)
    if normalize_embedding:
        # F.normalize(p=2, dim=2): y / max(||y||, 1e-12)
        #   == y * rsqrt(max(||y||^2, 1e-24)); rsqrt runs on the idle EUP.
        sq = jnp.sum(y * y, axis=-1, keepdims=True)
        y = y * jax.lax.rsqrt(jnp.maximum(sq, 1e-24))
    o_ref[...] = y.astype(o_ref.dtype)


def _gc_pre_kernel(adj_ref, xw_ref, *rest, add_self, use_bias,
                   normalize_embedding, tile_n):
    """y = adj @ (xW) [+ (xW)_rows] [+ b]  [, L2-normalize]; xW precomputed
    once in the wrapper (hoisted out of the per-row-tile loop)."""
    if use_bias:
        b_ref, o_ref = rest
    else:
        (o_ref,) = rest

    n = adj_ref.shape[2]
    dp = xw_ref.shape[-1]

    y = jnp.einsum("brn,bnd->brd", adj_ref[...], xw_ref[...],
                   preferred_element_type=jnp.float32)           # (BT,TN,Dp)
    if add_self:
        if tile_n == n:
            xw_rows = xw_ref[...]
        else:
            r0 = pl.multiple_of(pl.program_id(1) * tile_n, tile_n)
            xw_rows = xw_ref[:, pl.ds(r0, tile_n), :]
        y = y + xw_rows.astype(jnp.float32)
    if use_bias:
        y = y + b_ref[...].astype(jnp.float32).reshape(1, 1, dp)
    if normalize_embedding:
        sq = jnp.sum(y * y, axis=-1, keepdims=True)
        y = y * jax.lax.rsqrt(jnp.maximum(sq, 1e-24))
    o_ref[...] = y.astype(o_ref.dtype)


def graph_conv(x, adj, weight, bias, *, add_self=False,
               normalize_embedding=False, dropout=0.0,
               compute_dtype=None, max_row_tile=None):
    """Pallas GraphConv forward. x:[B,N,Din], adj:[B,N,N] -> [B,N,Dout]."""
    # TODO(synk): dropout is inference-mode identity here (module applies it
    # only in training); training dropout would use pltpu.prng_* in-kernel.
    B, N, Din = x.shape
    Dout = weight.shape[1]
    use_bias = bias is not None
    out_dtype = x.dtype
    if compute_dtype is None:
        compute_dtype = x.dtype      # opt-in bf16; never silently downcast f32
    compute_dtype = jnp.dtype(compute_dtype)

    # Lane-dense output: pad Dout to a multiple of 128 (full-width vst), slice
    # back afterwards.
    Dp = _round_up(Dout, _LANES)
    w_p = weight if Dp == Dout else jnp.pad(weight, ((0, 0), (0, Dp - Dout)))
    b_p = None
    if use_bias:
        b_p = bias.reshape(1, Dout).astype(jnp.float32)
        if Dp != Dout:
            b_p = jnp.pad(b_p, ((0, 0), (0, Dp - Dout)))

    # Contraction-order choice: the x@W matmul is hoisted to exactly one matmul
    # either way, so the MXU-shape-aware N^2 term decides, with a
    # resident-operand DMA/VMEM tiebreak (stream xW if it is narrower than x).
    cost_plain = _mxu_cost(N, N, Din) + _mxu_cost(N, Din, Dp)
    cost_pre = _mxu_cost(N, Din, Dp) + _mxu_cost(N, N, Dp)
    reorder = (cost_pre, N * Dp) < (cost_plain, N * Din)

    # Wrapper-side casts: DMA moves compute-dtype bytes, no per-step VPU cast.
    adj_c = adj.astype(compute_dtype)
    if reorder:
        feat = jnp.matmul(x.astype(compute_dtype), w_p.astype(compute_dtype),
                          preferred_element_type=jnp.float32)
        feat = feat.astype(compute_dtype)                  # xW, computed once
        feat_dim = Dp
    else:
        feat = x.astype(compute_dtype)
        feat_dim = Din

    vmem_cap = _vmem_capacity_bytes()
    item = compute_dtype.itemsize
    TILE_N, N_pad = _choose_row_tile(N, item, vmem_cap, max_row_tile)
    n_row_tiles = N_pad // TILE_N
    BT = _choose_batch_tile(B, N_pad, TILE_N, n_row_tiles)

    if N_pad != N:
        adj_c = jnp.pad(adj_c, ((0, 0), (0, N_pad - N), (0, N_pad - N)))
        feat = jnp.pad(feat, ((0, 0), (0, N_pad - N), (0, 0)))

    kernel = functools.partial(
        _gc_pre_kernel if reorder else _gc_fused_kernel,
        add_self=add_self, use_bias=use_bias,
        normalize_embedding=normalize_embedding, tile_n=TILE_N)

    # VMEM estimate (conservative: all blocks double-buffered), capped by the
    # queried per-core capacity with headroom (v7x: 64 MiB, v5e/v6e: 128 MiB).
    out_item = jnp.dtype(out_dtype).itemsize
    vmem_est = (2 * BT * TILE_N * N_pad * item
                + 2 * BT * TILE_N * Dp * out_item
                + 2 * BT * N_pad * feat_dim * item
                + (0 if reorder else 2 * Din * Dp * item)
                + 2 * Dp * 4)
    vmem_limit = int(min(int(vmem_cap * 0.9),
                         max(32 * 1024 * 1024, vmem_est * 3 // 2)))

    def _run(single_buffer_resident):
        def resident(block_shape, index_map):
            # Grid-invariant (or outer-axis-only) operands don't need a second
            # pipeline buffer; freeing that VMEM matters most on v7x (64 MiB).
            if single_buffer_resident:
                return pl.BlockSpec(block_shape, index_map,
                                    pipeline_mode=pl.Buffered(1))
            return pl.BlockSpec(block_shape, index_map)

        in_specs = [
            pl.BlockSpec((BT, TILE_N, N_pad), lambda bb, r: (bb, r, 0)),  # adj slab
            resident((BT, N_pad, feat_dim), lambda bb, r: (bb, 0, 0)),    # x / xW
        ]
        inputs = [adj_c, feat]
        if not reorder:
            in_specs.append(resident((Din, Dp), lambda bb, r: (0, 0)))    # W
            inputs.append(w_p.astype(compute_dtype))
        if use_bias:
            in_specs.append(resident((1, Dp), lambda bb, r: (0, 0)))      # bias
            inputs.append(b_p)

        return pl.pallas_call(
            kernel,
            out_shape=jax.ShapeDtypeStruct((B, N_pad, Dp), out_dtype),
            grid_spec=pltpu.PrefetchScalarGridSpec(
                num_scalar_prefetch=0,
                grid=(B // BT, n_row_tiles),
                in_specs=in_specs,
                out_specs=pl.BlockSpec((BT, TILE_N, Dp),
                                       lambda bb, r: (bb, r, 0)),
            ),
            compiler_params=pltpu.CompilerParams(
                dimension_semantics=("parallel", "parallel"),
                vmem_limit_bytes=vmem_limit),
        )(*inputs)

    try:
        out = _run(single_buffer_resident=True)
    except Exception:
        # Fallback if pl.Buffered(1) is rejected by this jax/libtpu version;
        # default double-buffering is always valid (costs some VMEM only).
        out = _run(single_buffer_resident=False)

    if N_pad != N or Dp != Dout:
        out = out[:, :N, :Dout]
    return out


def graph_conv_ref(x, adj, weight, bias, *, add_self=False,
                   normalize_embedding=False):
    """Pure-JAX reference mirroring the PyTorch forward."""
    y = jnp.matmul(adj, x)
    if add_self:
        y = y + x
    y = jnp.matmul(y, weight)
    if bias is not None:
        y = y + bias
    if normalize_embedding:
        norm = jnp.sqrt(jnp.sum(y * y, axis=2, keepdims=True))
        y = y / jnp.maximum(norm, 1e-12)
    return y


if __name__ == "__main__":
    key = jax.random.PRNGKey(0)

    def make_inputs(k, B, N, Din, Dout, with_bias=True):
        kx, kadj, kw, kb = jax.random.split(k, 4)
        x = jax.random.normal(kx, (B, N, Din), dtype=jnp.float32)
        adj = jax.random.uniform(kadj, (B, N, N), dtype=jnp.float32)
        w = jax.random.normal(kw, (Din, Dout), dtype=jnp.float32) * 0.1
        b = (jax.random.normal(kb, (Dout,), dtype=jnp.float32) * 0.1
             if with_bias else None)
        return x, adj, w, b

    k1, k2, k3, k4 = jax.random.split(key, 4)

    # A) module defaults: bias, no add_self, no normalize (fused path).
    x, adj, w, b = make_inputs(k1, B=2, N=16, Din=32, Dout=64)
    out = jax.block_until_ready(graph_conv(x, adj, w, b))
    ref = graph_conv_ref(x, adj, w, b)
    assert out.shape == ref.shape
    assert jnp.allclose(out, ref, atol=1e-4, rtol=1e-4)

    # B) add_self + normalize + no bias; Din >> Dout -> pre-projected (xW) path.
    x, adj, w, _ = make_inputs(k2, B=2, N=16, Din=256, Dout=64, with_bias=False)
    out = jax.block_until_ready(
        graph_conv(x, adj, w, None, add_self=True, normalize_embedding=True))
    ref = graph_conv_ref(x, adj, w, None, add_self=True,
                         normalize_embedding=True)
    assert jnp.allclose(out, ref, atol=1e-4, rtol=1e-4)

    # C) node-row tiling path (several adj row slabs per batch element).
    x, adj, w, b = make_inputs(k3, B=1, N=256, Din=32, Dout=64)
    out = jax.block_until_ready(
        graph_conv(x, adj, w, b, add_self=True, max_row_tile=64))
    ref = graph_conv_ref(x, adj, w, b, add_self=True)
    assert jnp.allclose(out, ref, atol=1e-3, rtol=1e-3)

    # D) bf16 MXU operands with f32 accumulation (wrapper-side cast).
    x, adj, w, b = make_inputs(k1, B=2, N=16, Din=32, Dout=64)
    out = jax.block_until_ready(
        graph_conv(x, adj, w, b, compute_dtype=jnp.bfloat16))
    ref = graph_conv_ref(x, adj, w, b)
    assert jnp.allclose(out, ref, atol=1e-1, rtol=1e-1)

    # E) awkward N (no multiple-of-8 divisor <= tile cap) -> padded-N path.
    x, adj, w, b = make_inputs(k4, B=2, N=132, Din=32, Dout=64)
    out = jax.block_until_ready(
        graph_conv(x, adj, w, b, add_self=True, max_row_tile=64))
    ref = graph_conv_ref(x, adj, w, b, add_self=True)
    assert out.shape == ref.shape
    assert jnp.allclose(out, ref, atol=1e-3, rtol=1e-3)

    print("KERNEL_OK")
</pallas_src>

<mosaic_0001>
module attributes {stable_mosaic.version = 11 : i64} {
  func.func @_gc_fused_kernel(%arg0: i32, %arg1: i32, %arg2: memref<1x16x16xf32, #tpu.memory_space<vmem>>, %arg3: memref<1x16x32xf32, #tpu.memory_space<vmem>>, %arg4: memref<32x128xf32, #tpu.memory_space<vmem>>, %arg5: memref<1x128xf32, #tpu.memory_space<vmem>>, %arg6: memref<1x16x128xf32, #tpu.memory_space<vmem>>) attributes {dimension_semantics = [#tpu.dimension_semantics<parallel>, #tpu.dimension_semantics<parallel>], iteration_bounds = array<i64: 2, 1>, scalar_prefetch = 0 : i64, scratch_operands = 0 : i64, tpu.core_type = #tpu.core_type<tc>, window_params = [{transform_indices = @transform_0, window_bounds = array<i64: 1, 16, 16>}, {pipeline_mode = #tpu.pipeline_mode<synchronous>, transform_indices = @transform_1, window_bounds = array<i64: 1, 16, 32>}, {pipeline_mode = #tpu.pipeline_mode<synchronous>, transform_indices = @transform_2, window_bounds = array<i64: 32, 128>}, {pipeline_mode = #tpu.pipeline_mode<synchronous>, transform_indices = @transform_3, window_bounds = array<i64: 1, 128>}, {transform_indices = @transform_4, window_bounds = array<i64: 1, 16, 128>}]} {
    %c0 = arith.constant 0 : index
    %c0_0 = arith.constant 0 : index
    %c0_1 = arith.constant 0 : index
    %0 = vector.load %arg2[%c0, %c0_0, %c0_1] : memref<1x16x16xf32, #tpu.memory_space<vmem>>, vector<1x16x16xf32>
    %c0_2 = arith.constant 0 : index
    %c0_3 = arith.constant 0 : index
    %c0_4 = arith.constant 0 : index
    %1 = vector.load %arg3[%c0_2, %c0_3, %c0_4] : memref<1x16x32xf32, #tpu.memory_space<vmem>>, vector<1x16x32xf32>
    %c0_5 = arith.constant 0 : index
    %c0_6 = arith.constant 0 : index
    %2 = vector.load %arg4[%c0_5, %c0_6] : memref<32x128xf32, #tpu.memory_space<vmem>>, vector<32x128xf32>
    "tpu.trace_start"() <{level = 10 : i32, message = "brn,bnd->brd"}> : () -> ()
    %cst = arith.constant dense<0.000000e+00> : vector<1x16x32xf32>
    %3 = tpu.matmul %0, %1, %cst {dimension_numbers = #tpu.dot_dimension_numbers<[2], [1], [1], [2], [0, 0, 0, 1, 1, 2], [0], [0]>} : vector<1x16x16xf32>, vector<1x16x32xf32>, vector<1x16x32xf32> -> vector<1x16x32xf32>
    "tpu.trace_stop"() : () -> ()
    %4 = vector.shape_cast %3 : vector<1x16x32xf32> to vector<16x32xf32>
    %cst_7 = arith.constant dense<0.000000e+00> : vector<16x128xf32>
    %5 = tpu.matmul %4, %2, %cst_7 {dimension_numbers = #tpu.dot_dimension_numbers<[1], [0], [0], [1], [0, 0, 1, 1], [], []>} : vector<16x32xf32>, vector<32x128xf32>, vector<16x128xf32> -> vector<16x128xf32>
    %6 = vector.shape_cast %5 : vector<16x128xf32> to vector<1x16x128xf32>
    %c0_8 = arith.constant 0 : index
    %c0_9 = arith.constant 0 : index
    %7 = vector.load %arg5[%c0_8, %c0_9] : memref<1x128xf32, #tpu.memory_space<vmem>>, vector<1x128xf32>
    %8 = vector.shape_cast %7 : vector<1x128xf32> to vector<1x1x128xf32>
    %9 = vector.broadcast %8 : vector<1x1x128xf32> to vector<1x16x128xf32>
    %10 = arith.addf %6, %9 : vector<1x16x128xf32>
    %c0_10 = arith.constant 0 : index
    %c0_11 = arith.constant 0 : index
    %c0_12 = arith.constant 0 : index
    %11 = vector.load %arg6[%c0_10, %c0_11, %c0_12] : memref<1x16x128xf32, #tpu.memory_space<vmem>>, vector<1x16x128xf32>
    tpu.vector_store %arg6[%c0_10, %c0_11, %c0_12], %10 {strides = array<i32>} : memref<1x16x128xf32, #tpu.memory_space<vmem>>, vector<1x16x128xf32>,
    return
  }
  func.func @transform_0(%arg0: i32, %arg1: i32) -> (i32, i32, i32) {
    %c0_i32 = arith.constant 0 : i32
    %c0_i32_0 = arith.constant 0 : i32
    return %arg0, %arg1, %c0_i32 : i32, i32, i32
  }
  func.func @transform_1(%arg0: i32, %arg1: i32) -> (i32, i32, i32) {
    %c0_i32 = arith.constant 0 : i32
    %c0_i32_0 = arith.constant 0 : i32
    %c0_i32_1 = arith.constant 0 : i32
    return %arg0, %c0_i32, %c0_i32_0 : i32, i32, i32
  }
  func.func @transform_2(%arg0: i32, %arg1: i32) -> (i32, i32) {
    %c0_i32 = arith.constant 0 : i32
    %c0_i32_0 = arith.constant 0 : i32
    %c0_i32_1 = arith.constant 0 : i32
    return %c0_i32, %c0_i32_0 : i32, i32
  }
  func.func @transform_3(%arg0: i32, %arg1: i32) -> (i32, i32) {
    %c0_i32 = arith.constant 0 : i32
    %c0_i32_0 = arith.constant 0 : i32
    %c0_i32_1 = arith.constant 0 : i32
    return %c0_i32, %c0_i32_0 : i32, i32
  }
  func.func @transform_4(%arg0: i32, %arg1: i32) -> (i32, i32, i32) {
    %c0_i32 = arith.constant 0 : i32
    %c0_i32_0 = arith.constant 0 : i32
    return %arg0, %arg1, %c0_i32 : i32, i32, i32
  }
}

module attributes {stable_mosaic.version = 11 : i64} {
  func.func @_gc_fused_kernel(%arg0: i32, %arg1: i32, %arg2: memref<1x16x16xf32, #tpu.memory_space<vmem>>, %arg3: memref<1x16x32xf32, #tpu.memory_space<vmem>>, %arg4: memref<32x128xf32, #tpu.memory_space<vmem>>, %arg5: memref<1x128xf32, #tpu.memory_space<vmem>>, %arg6: memref<1x16x128xf32, #tpu.memory_space<vmem>>) attributes {dimension_semantics = [#tpu.dimension_semantics<parallel>, #tpu.dimension_semantics<parallel>], iteration_bounds = array<i64: 2, 1>, scalar_prefetch = 0 : i64, scratch_operands = 0 : i64, tpu.core_type = #tpu.core_type<tc>, window_params = [{transform_indices = @transform_0, window_bounds = array<i64: 1, 16, 16>}, {transform_indices = @transform_1, window_bounds = array<i64: 1, 16, 32>}, {pipeline_mode = #tpu.pipeline_mode<synchronous>, transform_indices = @transform_2, window_bounds = array<i64: 32, 128>}, {pipeline_mode = #tpu.pipeline_mode<synchronous>, transform_indices = @transform_3, window_bounds = array<i64: 1, 128>}, {transform_indices = @transform_4, window_bounds = array<i64: 1, 16, 128>}]} {
    %c0 = arith.constant 0 : index
    %c0_0 = arith.constant 0 : index
    %c0_1 = arith.constant 0 : index
    %0 = vector.load %arg2[%c0, %c0_0, %c0_1] : memref<1x16x16xf32, #tpu.memory_space<vmem>>, vector<1x16x16xf32>
    %c0_2 = arith.constant 0 : index
    %c0_3 = arith.constant 0 : index
    %c0_4 = arith.constant 0 : index
    %1 = vector.load %arg3[%c0_2, %c0_3, %c0_4] : memref<1x16x32xf32, #tpu.memory_space<vmem>>, vector<1x16x32xf32>
    %c0_5 = arith.constant 0 : index
    %c0_6 = arith.constant 0 : index
    %2 = vector.load %arg4[%c0_5, %c0_6] : memref<32x128xf32, #tpu.memory_space<vmem>>, vector<32x128xf32>
    "tpu.trace_start"() <{level = 10 : i32, message = "brn,bnd->brd"}> : () -> ()
    %cst = arith.constant dense<0.000000e+00> : vector<1x16x32xf32>
    %3 = tpu.matmul %0, %1, %cst {dimension_numbers = #tpu.dot_dimension_numbers<[2], [1], [1], [2], [0, 0, 0, 1, 1, 2], [0], [0]>} : vector<1x16x16xf32>, vector<1x16x32xf32>, vector<1x16x32xf32> -> vector<1x16x32xf32>
    "tpu.trace_stop"() : () -> ()
    %4 = vector.shape_cast %3 : vector<1x16x32xf32> to vector<16x32xf32>
    %cst_7 = arith.constant dense<0.000000e+00> : vector<16x128xf32>
    %5 = tpu.matmul %4, %2, %cst_7 {dimension_numbers = #tpu.dot_dimension_numbers<[1], [0], [0], [1], [0, 0, 1, 1], [], []>} : vector<16x32xf32>, vector<32x128xf32>, vector<16x128xf32> -> vector<16x128xf32>
    %6 = vector.shape_cast %5 : vector<16x128xf32> to vector<1x16x128xf32>
    %c0_8 = arith.constant 0 : index
    %c0_9 = arith.constant 0 : index
    %7 = vector.load %arg5[%c0_8, %c0_9] : memref<1x128xf32, #tpu.memory_space<vmem>>, vector<1x128xf32>
    %8 = vector.shape_cast %7 : vector<1x128xf32> to vector<1x1x128xf32>
    %9 = vector.broadcast %8 : vector<1x1x128xf32> to vector<1x16x128xf32>
    %10 = arith.addf %6, %9 : vector<1x16x128xf32>
    %c0_10 = arith.constant 0 : index
    %c0_11 = arith.constant 0 : index
    %c0_12 = arith.constant 0 : index
    %11 = vector.load %arg6[%c0_10, %c0_11, %c0_12] : memref<1x16x128xf32, #tpu.memory_space<vmem>>, vector<1x16x128xf32>
    tpu.vector_store %arg6[%c0_10, %c0_11, %c0_12], %10 {strides = array<i32>} : memref<1x16x128xf32, #tpu.memory_space<vmem>>, vector<1x16x128xf32>,
    return
  }
  func.func @transform_0(%arg0: i32, %arg1: i32) -> (i32, i32, i32) {
    %c0_i32 = arith.constant 0 : i32
    %c0_i32_0 = arith.constant 0 : i32
    return %arg0, %arg1, %c0_i32 : i32, i32, i32
  }
  func.func @transform_1(%arg0: i32, %arg1: i32) -> (i32, i32, i32) {
    %c0_i32 = arith.constant 0 : i32
    %c0_i32_0 = arith.constant 0 : i32
    %c0_i32_1 = arith.constant 0 : i32
    return %arg0, %c0_i32, %c0_i32_0 : i32, i32, i32
  }
  func.func @transform_2(%arg0: i32, %arg1: i32) -> (i32, i32) {
    %c0_i32 = arith.constant 0 : i32
    %c0_i32_0 = arith.constant 0 : i32
    %c0_i32_1 = arith.constant 0 : i32
    return %c0_i32, %c0_i32_0 : i32, i32
  }
  func.func @transform_3(%arg0: i32, %arg1: i32) -> (i32, i32) {
    %c0_i32 = arith.constant 0 : i32
    %c0_i32_0 = arith.constant 0 : i32
    %c0_i32_1 = arith.constant 0 : i32
    return %c0_i32, %c0_i32_0 : i32, i32
  }
  func.func @transform_4(%arg0: i32, %arg1: i32) -> (i32, i32, i32) {
    %c0_i32 = arith.constant 0 : i32
    %c0_i32_0 = arith.constant 0 : i32
    return %arg0, %arg1, %c0_i32 : i32, i32, i32
  }
}

</mosaic_0001>

<llo_original>
// kernel: tpu_custom_call.1
$region0: #{tpu_custom_call.1}
  #allocation0 [shape = 'u32[]', space=smem, size = 0x4, offset = 0x4, fixed_abs, tag = 'smem constant byte address 0x4 - core index']
  #allocation1 [shape = 'u32[144,128]{1,0:T(1,128)}', space=vmem, size = 0x12000, scoped, tag = 'internal scratch']
  %s0 = inlined_call_operand.hbm [shape: f32[2,16,16], index: 0, kind: input, shape index: {}]
  %s1 = inlined_call_operand.hbm [shape: f32[2,16,32], index: 1, kind: input, shape index: {}]
  %s2 = inlined_call_operand.hbm [shape: f32[32,128], index: 2, kind: input, shape index: {}]
  %s3 = inlined_call_operand.vmem [shape: f32[1,128], index: 3, kind: input, shape index: {}]
  %s4 = inlined_call_operand.hbm [shape: f32[2,16,128], index: 4, kind: output, shape index: {}]
  %s5 = sld [smem:[#allocation0]]
  $region61: #{tpu_custom_call.1} parent=0
    _
  %s7 = ssub.s32 1, %s5
  %s8 = scalar_select 0, %s7, %s5
  $region1: #{tpu_custom_call.1} parent=0
    #allocation2 [shape = 'u8[16384]{0}', space=vmem, size = 0x4000, scoped, tag = 'input window, operand 0']
    #allocation3 [shape = 's32[2]{0}', space=sflag, size = 0x8, scoped, tag = 'scoped memory for tpu_custom_call.1']
    #allocation4 [shape = 's32[2]{0}', space=sflag, size = 0x8, scoped, tag = 'scoped memory for tpu_custom_call.1']
    #allocation5 [shape = 'u8[8192]{0}', space=vmem, size = 0x2000, scoped, tag = 'input window, operand 1, single buffered']
    #allocation6 [shape = 's32[1]{0}', space=sflag, size = 0x4, scoped, tag = 'scoped memory for tpu_custom_call.1']
    #allocation7 [shape = 'u8[16384]{0}', space=vmem, size = 0x4000, scoped, tag = 'input window, operand 2, single buffered']
    #allocation8 [shape = 'u8[16384]{0}', space=vmem, size = 0x4000, scoped, tag = 'output window, operand 0']
    %9 = vsyncpa [#allocation3], 0
    %s10 = scalar_lea.sflag [#allocation3], 1
    %11 = vsyncpa %s10, 0
    %12 = vsyncpa [#allocation6], 0
    %13 = vsyncpa [#allocation4], 0
    %s14 = scalar_lea.sflag [#allocation4], 1
    %15 = vsyncpa %s14, 0
    loop: start=0, step=1, limit=4
    $region2: #{tpu_custom_call.1} parent=1 // loop_pre_header
      _
    $region3: #{tpu_custom_call.1} parent=1 // loop_header
      %s17 = sphi 0, %s21
      %p18 = scmp.ge.s32.totalorder %s17, 4
      %s24 = sphi 0, %s36
      %s25 = sphi 0, %s32
      %s26 = sphi 0, %s24
      %s27 = sphi 0, %s25
      %s28 = sphi 0, %s26
      %s29 = sphi 0, %s27
      %s41 = sphi 0, %s43
      %s44 = sphi 0, %s41
      %s45 = sphi 0, %s44
      %s61 = sphi 0, %s45
      %s67 = sphi 0, %s69
      %s70 = sphi 0, %s67
      %s71 = sphi 0, %s70
      %s87 = sphi 0, %s71
      %s91 = sphi 0, %s91
      %s93 = sphi 0, %s91
      %s94 = sphi 0, %s93
      %s108 = sphi 0, %s94
      %s112 = sphi 0, %s112
      %s114 = sphi 0, %s112
      %s115 = sphi 0, %s114
      %s129 = sphi 0, %s115
      %s137 = sphi 0, %s139
      %s140 = sphi 0, %s137
      %s141 = sphi 0, %s140
      %s157 = sphi 0, %s141
    $region4: #{tpu_custom_call.1} parent=1 // loop_header_branch
      %20 = sbr.rel (%p18) target = $region8
    $region5: #{tpu_custom_call.1} parent=1 // loop_body
      %s22 = ssub.s32 %s17, 1
      %s23 = ssub.s32 %s17, 2
      %s30 = sadd.s32 1, %s25
      %p31 = scmp.ge.s32.totalorder %s30, 1
      %s32 = scalar_select %p31, 0, %s30
      %s33 = sadd.s32 1, %s24
      %s34 = scalar_select %p31, %s33, %s24
      %p35 = scmp.ge.s32.totalorder %s34, 2
      %s36 = scalar_select %p35, 0, %s34
      %s37 = ssub.s32 %s24, %s36
      %s38 = ssub.s32 %s25, %s32
      %s39 = sor.u32 %s37, %s38
      %p40 = scmp.eq.s32.totalorder %s39, 0
      %s42 = sadd.s32 %s41, 1
      %s43 = scalar_select %p40, %s41, %s42
      %p46 = pneg %p40
      %p47 = scmp.eq.s32.totalorder %s17, 1
      %p48 = por %p46, %p47
      %p49 = scmp.ne.s32.totalorder %s41, %s44
      %p50 = scmp.eq.s32.totalorder %s17, 0
      %p51 = por %p49, %p50
      %p52 = scmp.ne.s32.totalorder %s41, %s44
      %p53 = scmp.eq.s32.totalorder %s22, 1
      %p54 = por %p52, %p53
      %p55 = scmp.ne.s32.totalorder %s44, %s45
      %p56 = scmp.eq.s32.totalorder %s22, 0
      %p57 = por %p55, %p56
      %p58 = scmp.ne.s32.totalorder %s44, %s45
      %p59 = scmp.eq.s32.totalorder %s23, 1
      %p60 = por %p58, %p59
      %p62 = scmp.ne.s32.totalorder %s45, %s61
      %p63 = scmp.eq.s32.totalorder %s23, 0
      %p64 = por %p62, %p63
      %s65 = ssub.s32 %s24, %s36
      %p66 = scmp.eq.s32.totalorder %s65, 0
      %s68 = sadd.s32 %s67, 1
      %s69 = scalar_select %p66, %s67, %s68
      %p72 = pneg %p66
      %p73 = scmp.eq.s32.totalorder %s17, 1
      %p74 = por %p72, %p73
      %p75 = scmp.ne.s32.totalorder %s67, %s70
      %p76 = scmp.eq.s32.totalorder %s17, 0
      %p77 = por %p75, %p76
      %p78 = scmp.ne.s32.totalorder %s67, %s70
      %p79 = scmp.eq.s32.totalorder %s22, 1
      %p80 = por %p78, %p79
      %p81 = scmp.ne.s32.totalorder %s70, %s71
      %p82 = scmp.eq.s32.totalorder %s22, 0
      %p83 = por %p81, %p82
      %p84 = scmp.ne.s32.totalorder %s70, %s71
      %p85 = scmp.eq.s32.totalorder %s23, 1
      %p86 = por %p84, %p85
      %p88 = scmp.ne.s32.totalorder %s71, %s87
      %p89 = scmp.eq.s32.totalorder %s23, 0
      %p90 = por %p88, %p89
      %s92 = sadd.s32 %s91, 1
      %p95 = scmp.eq.s32.totalorder %s17, 1
      %p96 = scmp.ne.s32.totalorder %s91, %s93
      %p97 = scmp.eq.s32.totalorder %s17, 0
      %p98 = por %p96, %p97
      %p99 = scmp.ne.s32.totalorder %s91, %s93
      %p100 = scmp.eq.s32.totalorder %s22, 1
      %p101 = por %p99, %p100
      %p102 = scmp.ne.s32.totalorder %s93, %s94
      %p103 = scmp.eq.s32.totalorder %s22, 0
      %p104 = por %p102, %p103
      %p105 = scmp.ne.s32.totalorder %s93, %s94
      %p106 = scmp.eq.s32.totalorder %s23, 1
      %p107 = por %p105, %p106
      %p109 = scmp.ne.s32.totalorder %s94, %s108
      %p110 = scmp.eq.s32.totalorder %s23, 0
      %p111 = por %p109, %p110
      %s113 = sadd.s32 %s112, 1
      %p116 = scmp.eq.s32.totalorder %s17, 1
      %p117 = scmp.ne.s32.totalorder %s112, %s114
      %p118 = scmp.eq.s32.totalorder %s17, 0
      %p119 = por %p117, %p118
      %p120 = scmp.ne.s32.totalorder %s112, %s114
      %p121 = scmp.eq.s32.totalorder %s22, 1
      %p122 = por %p120, %p121
      %p123 = scmp.ne.s32.totalorder %s114, %s115
      %p124 = scmp.eq.s32.totalorder %s22, 0
      %p125 = por %p123, %p124
      %p126 = scmp.ne.s32.totalorder %s114, %s115
      %p127 = scmp.eq.s32.totalorder %s23, 1
      %p128 = por %p126, %p127
      %p130 = scmp.ne.s32.totalorder %s115, %s129
      %p131 = scmp.eq.s32.totalorder %s23, 0
      %p132 = por %p130, %p131
      %s133 = ssub.s32 %s24, %s36
      %s134 = ssub.s32 %s25, %s32
      %s135 = sor.u32 %s133, %s134
      %p136 = scmp.eq.s32.totalorder %s135, 0
      %s138 = sadd.s32 %s137, 1
      %s139 = scalar_select %p136, %s137, %s138
      %p142 = pneg %p136
      %p143 = scmp.eq.s32.totalorder %s17, 1
      %p144 = por %p142, %p143
      %p145 = scmp.ne.s32.totalorder %s137, %s140
      %p146 = scmp.eq.s32.totalorder %s17, 0
      %p147 = por %p145, %p146
      %p148 = scmp.ne.s32.totalorder %s137, %s140
      %p149 = scmp.eq.s32.totalorder %s22, 1
      %p150 = por %p148, %p149
      %p151 = scmp.ne.s32.totalorder %s140, %s141
      %p152 = scmp.eq.s32.totalorder %s22, 0
      %p153 = por %p151, %p152
      %p154 = scmp.ne.s32.totalorder %s140, %s141
      %p155 = scmp.eq.s32.totalorder %s23, 1
      %p156 = por %p154, %p155
      %p158 = scmp.ne.s32.totalorder %s141, %s157
      %p159 = scmp.eq.s32.totalorder %s23, 0
      %p160 = por %p158, %p159
      %p161 = scmp.le.s32.totalorder 1, %s17
      %p162 = scmp.lt.s32.totalorder %s17, 3
      %p163 = pnand %p161, %p162
      %p164 = pneg %p163
      // Predicated region
      $region9: #{tpu_custom_call.1} parent=5 // pred_check
        _
      $region10: #{tpu_custom_call.1} parent=5 // pred_check_branch
        %166 = sbr.rel (%p163) target = $region12
      $region11: #{tpu_custom_call.1} parent=5 // pred_region
        %s167 = ssub.s32 %s17, 1
        // Predicated region
        $region13: #{tpu_custom_call.1} parent=11 // pred_check
          %p168 = pneg %p83
        $region14: #{tpu_custom_call.1} parent=11 // pred_check_branch
          %170 = sbr.rel (%p168) target = $region16
        $region15: #{tpu_custom_call.1} parent=11 // pred_region
          %s172 = ssub.s32 256, 256
          %173 = vsyncadd [#allocation6], %s172
          %s174 = smul.addr %s26, 2
          %s175 = smul.addr %s174, 128
          %s176 = scalar_lea.hbm %s1, %s175
          %s177 = sshll.u32 [#allocation5], 4
          %s178 = int_to_ptr.vmem [resolvable:$true] %s177
          %183 = dma.hbm_to_vmem [thread:$0]  %s176, 256, %s178, [#allocation6], 128, 128, 8
        $region16: #{tpu_custom_call.1} parent=11 // pred_fallthru
          _
        // Predicated region
        $region17: #{tpu_custom_call.1} parent=11 // pred_check
          %p184 = pneg %p104
        $region18: #{tpu_custom_call.1} parent=11 // pred_check_branch
          %186 = sbr.rel (%p184) target = $region20
        $region19: #{tpu_custom_call.1} parent=11 // pred_region
          %s188 = ssub.s32 512, 512
          %189 = vsyncadd [#allocation6], %s188
          %s190 = sshll.u32 [#allocation7], 4
          %s191 = int_to_ptr.vmem [resolvable:$true] %s190
          %196 = dma.hbm_to_vmem [thread:$0]  %s2, 512, %s191, [#allocation6], 128, 128, 8
        $region20: #{tpu_custom_call.1} parent=11 // pred_fallthru
          _
        // Predicated region
        $region21: #{tpu_custom_call.1} parent=11 // pred_check
          %p197 = pneg %p125
        $region22: #{tpu_custom_call.1} parent=11 // pred_check_branch
          %199 = sbr.rel (%p197) target = $region24
        $region23: #{tpu_custom_call.1} parent=11 // pred_region
          _
        $region24: #{tpu_custom_call.1} parent=11 // pred_fallthru
          _
      $region12: #{tpu_custom_call.1} parent=5 // pred_fallthru
        _
      %p200 = scmp.lt.s32.totalorder %s17, 2
      // Predicated region
      $region25: #{tpu_custom_call.1} parent=5 // pred_check
        %p201 = pneg %p200
      $region26: #{tpu_custom_call.1} parent=5 // pred_check_branch
        %203 = sbr.rel (%p201) target = $region28
      $region27: #{tpu_custom_call.1} parent=5 // pred_region
        // Predicated region
        $region29: #{tpu_custom_call.1} parent=27 // pred_check
          %p204 = pneg %p51
        $region30: #{tpu_custom_call.1} parent=27 // pred_check_branch
          %206 = sbr.rel (%p204) target = $region32
        $region31: #{tpu_custom_call.1} parent=27 // pred_region
          %s207 = sand.u32 %s41, 1
          %s208 = scalar_lea.sflag [#allocation3], %s207
          %s209 = sand.u32 %s41, 1
          %s210 = smul.addr %s209, 16
          %s211 = scalar_lea.vmem [#allocation2], %s210
          %s212 = smul.u32 2, %s25
          %s214 = ssub.s32 256, 256
          %215 = vsyncadd %s208, %s214
          %s216 = smul.addr %s24, 2
          %s217 = sadd.s32 %s212, %s216
          %s218 = smul.addr %s217, 128
          %s219 = scalar_lea.hbm %s0, %s218
          %s220 = sshll.u32 %s211, 4
          %s221 = int_to_ptr.vmem [resolvable:$true] %s220
          %226 = dma.hbm_to_vmem [thread:$0]  %s219, 256, %s221, %s208, 128, 128, 8
        $region32: #{tpu_custom_call.1} parent=27 // pred_fallthru
          _
      $region28: #{tpu_custom_call.1} parent=5 // pred_fallthru
        _
      %p227 = scmp.le.s32.totalorder 1, %s17
      %p228 = scmp.lt.s32.totalorder %s17, 3
      %p229 = pnand %p227, %p228
      %p230 = pneg %p229
      // Predicated region
      $region33: #{tpu_custom_call.1} parent=5 // pred_check
        _
      $region34: #{tpu_custom_call.1} parent=5 // pred_check_branch
        %232 = sbr.rel (%p229) target = $region36
      $region35: #{tpu_custom_call.1} parent=5 // pred_region
        %s233 = ssub.s32 %s17, 1
        %s234 = sand.u32 %s44, 1
        %s235 = scalar_lea.sflag [#allocation3], %s234
        %s236 = sand.u32 %s44, 1
        %s237 = smul.addr %s236, 16
        %s238 = scalar_lea.vmem [#allocation2], %s237
        // Predicated region
        $region37: #{tpu_custom_call.1} parent=35 // pred_check
          %p239 = pneg %p57
        $region38: #{tpu_custom_call.1} parent=35 // pred_check_branch
          %241 = sbr.rel (%p239) target = $region40
        $region39: #{tpu_custom_call.1} parent=35 // pred_region
          %242 = dma.done %s235, 256
        $region40: #{tpu_custom_call.1} parent=35 // pred_fallthru
          _
        // Predicated region
        $region41: #{tpu_custom_call.1} parent=35 // pred_check
          %p243 = pneg %p83
        $region42: #{tpu_custom_call.1} parent=35 // pred_check_branch
          %245 = sbr.rel (%p243) target = $region44
        $region43: #{tpu_custom_call.1} parent=35 // pred_region
          %246 = dma.done [#allocation6], 256
        $region44: #{tpu_custom_call.1} parent=35 // pred_fallthru
          _
        // Predicated region
        $region45: #{tpu_custom_call.1} parent=35 // pred_check
          %p247 = pneg %p104
        $region46: #{tpu_custom_call.1} parent=35 // pred_check_branch
          %249 = sbr.rel (%p247) target = $region48
        $region47: #{tpu_custom_call.1} parent=35 // pred_region
          %250 = dma.done [#allocation6], 512
        $region48: #{tpu_custom_call.1} parent=35 // pred_fallthru
          _
        %s251 = sand.u32 %s44, 1
        %s252 = scalar_lea.sflag [#allocation3], %s251
        %s253 = sand.u32 %s44, 1
        %s254 = smul.addr %s253, 16
        %s255 = scalar_lea.vmem [#allocation2], %s254
        %p256 = pneg %p57
        %p257 = pneg %p54
        %p258 = pneg %p83
        %p259 = pneg %p80
        %p260 = pneg %p104
        %p261 = pneg %p101
        %p262 = pneg %p125
        %p263 = pneg %p122
        %p264 = pneg %p153
        %p265 = pneg %p150
        %s266 = sand.u32 %s140, 1
        %s267 = scalar_lea.sflag [#allocation4], %s266
        %s268 = sand.u32 %s140, 1
        %s269 = smul.addr %s268, 16
        %s270 = scalar_lea.vmem [#allocation8], %s269
        %s271 = smul.u32 2, %s27
        %s272 = smul.u32 2, %s27
        %v273 = vld [vmem:[%s238] sm:$0xff]
        %v274 = vld [vmem:[%s238 + $0x8] sm:$0xff]
        %v275 = vld [vmem:[#allocation5] sm:$0xff]
        %v276 = vld [vmem:[#allocation5 + $0x8] sm:$0xff]
        %v277 = vld [vmem:[#allocation7] sm:$0xff]
        %v278 = vld [vmem:[#allocation7 + $0x8] sm:$0xff]
        %v279 = vld [vmem:[#allocation7 + $0x10] sm:$0xff]
        %v280 = vld [vmem:[#allocation7 + $0x18] sm:$0xff]
        %vm281 = vcmask 130048
        %v283 = vsel %vm281, %v273, 0
        %v286 = vsel %vm281, %v274, 0
        %288 = vmatprep.subr.mxu0 0.0
        %289 = vmatpush1.msra.mxu0 %v275
        %290 = vmatprep.subr.mxu0 0.0
        %291 = vmatpush1.msra.mxu0 %v276
        %292 = vmatprep.subr.mxu0 0.0
        %293 = vmatpush1.msra.mxu0 0.0
        %294 = vmatprep.subr.mxu0 0.0
        %295 = vmatpush1.msra.mxu0 0.0
        %296 = vmatprep.subr.mxu0 0.0
        %297 = vmatpush1.msra.mxu0 0.0
        %298 = vmatprep.subr.mxu0 0.0
        %299 = vmatpush1.msra.mxu0 0.0
        %300 = vmatprep.subr.mxu0 0.0
        %301 = vmatpush1.msra.mxu0 0.0
        %302 = vmatprep.subr.mxu0 0.0
        %303 = vmatpush1.msra.mxu0 0.0
        %304 = vmatprep.subr.mxu0 0.0
        %305 = vmatpush1.msra.mxu0 0.0
        %306 = vmatprep.subr.mxu0 0.0
        %307 = vmatpush1.msra.mxu0 0.0
        %308 = vmatprep.subr.mxu0 0.0
        %309 = vmatpush1.msra.mxu0 0.0
        %310 = vmatprep.subr.mxu0 0.0
        %311 = vmatpush1.msra.mxu0 0.0
        %312 = vmatprep.subr.mxu0 0.0
        %313 = vmatpush1.msra.mxu0 0.0
        %314 = vmatprep.subr.mxu0 0.0
        %315 = vmatpush1.msra.mxu0 0.0
        %316 = vmatprep.subr.mxu0 0.0
        %317 = vmatpush1.msra.mxu0 0.0
        %318 = vmatprep.subr.mxu0 0.0
        %319 = vmatpush1.msra.mxu0 0.0
        %320 = vmatprep.subr.mxu0 0.0
        %321 = vmatpush1.msra.mxu0 0.0
        %322 = vmatprep.subr.mxu0 0.0
        %323 = vmatpush1.msra.mxu0 0.0
        %324 = vmatprep.subr.mxu0 0.0
        %325 = vmatpush1.msra.mxu0 0.0
        %326 = vmatprep.subr.mxu0 0.0
        %327 = vmatpush1.msra.mxu0 0.0
        %328 = vmatprep.subr.mxu0 0.0
        %329 = vmatpush1.msra.mxu0 0.0
        %330 = vmatprep.subr.mxu0 0.0
        %331 = vmatpush1.msra.mxu0 0.0
        %332 = vmatprep.subr.mxu0 0.0
        %333 = vmatpush1.msra.mxu0 0.0
        %334 = vmatprep.subr.mxu0 0.0
        %335 = vmatpush1.msra.mxu0 0.0
        %336 = vmatprep.subr.mxu0 0.0
        %337 = vmatpush1.msra.mxu0 0.0
        %338 = vmatprep.subr.mxu0 0.0
        %339 = vmatpush1.msra.mxu0 0.0
        %340 = vmatprep.subr.mxu0 0.0
        %341 = vmatpush1.msra.mxu0 0.0
        %342 = vmatprep.subr.mxu0 0.0
        %343 = vmatpush1.msra.mxu0 0.0
        %344 = vmatprep.subr.mxu0 0.0
        %345 = vmatpush1.msra.mxu0 0.0
        %346 = vmatprep.subr.mxu0 0.0
        %347 = vmatpush1.msra.mxu0 0.0
        %348 = vmatprep.subr.mxu0 0.0
        %349 = vmatpush1.msra.mxu0 0.0
        %350 = vmatprep.subr.mxu0 0.0
        %351 = vmatpush1.msra.mxu0 0.0
        %352 = vmatprep.mubr.f32.mxu0 0.0
        %353 = vmatmul.mubr.f32.gmra.mrb[0].mxu0 %v283
        %v354 = vpop.f32.mrb[0].mxu0
        %v355 = vadd.f32 0.0, %v354
        %v356 = vpop.f32.mrb[0].mxu0
        %357 = vmatprep.mubr.f32.mxu0 0.0
        %358 = vmatmul.mubr.f32.gmra.mrb[0].mxu0 %v286
        %v359 = vpop.f32.mrb[0].mxu0
        %v360 = vadd.f32 0.0, %v359
        %v361 = vpop.f32.mrb[0].mxu0
        %362 = vdwg.mxu0
        %vm363 = vcmask 261120
        %v365 = vsel %vm363, %v355, 0
        %v368 = vsel %vm363, %v360, 0
        %370 = vmatprep.subr.mxu0 0.0
        %371 = vmatpush1.msra.mxu0 %v277
        %372 = vmatprep.subr.mxu0 0.0
        %373 = vmatpush1.msra.mxu0 %v278
        %374 = vmatprep.subr.mxu0 0.0
        %375 = vmatpush1.msra.mxu0 %v279
        %376 = vmatprep.subr.mxu0 0.0
        %377 = vmatpush1.msra.mxu0 %v280
        %378 = vmatprep.subr.mxu0 0.0
        %379 = vmatpush1.msra.mxu0 0.0
        %380 = vmatprep.subr.mxu0 0.0
        %381 = vmatpush1.msra.mxu0 0.0
        %382 = vmatprep.subr.mxu0 0.0
        %383 = vmatpush1.msra.mxu0 0.0
        %384 = vmatprep.subr.mxu0 0.0
        %385 = vmatpush1.msra.mxu0 0.0
        %386 = vmatprep.subr.mxu0 0.0
        %387 = vmatpush1.msra.mxu0 0.0
        %388 = vmatprep.subr.mxu0 0.0
        %389 = vmatpush1.msra.mxu0 0.0
        %390 = vmatprep.subr.mxu0 0.0
        %391 = vmatpush1.msra.mxu0 0.0
        %392 = vmatprep.subr.mxu0 0.0
        %393 = vmatpush1.msra.mxu0 0.0
        %394 = vmatprep.subr.mxu0 0.0
        %395 = vmatpush1.msra.mxu0 0.0
        %396 = vmatprep.subr.mxu0 0.0
        %397 = vmatpush1.msra.mxu0 0.0
        %398 = vmatprep.subr.mxu0 0.0
        %399 = vmatpush1.msra.mxu0 0.0
        %400 = vmatprep.subr.mxu0 0.0
        %401 = vmatpush1.msra.mxu0 0.0
        %402 = vmatprep.subr.mxu0 0.0
        %403 = vmatpush1.msra.mxu0 0.0
        %404 = vmatprep.subr.mxu0 0.0
        %405 = vmatpush1.msra.mxu0 0.0
        %406 = vmatprep.subr.mxu0 0.0
        %407 = vmatpush1.msra.mxu0 0.0
        %408 = vmatprep.subr.mxu0 0.0
        %409 = vmatpush1.msra.mxu0 0.0
        %410 = vmatprep.subr.mxu0 0.0
        %411 = vmatpush1.msra.mxu0 0.0
        %412 = vmatprep.subr.mxu0 0.0
        %413 = vmatpush1.msra.mxu0 0.0
        %414 = vmatprep.subr.mxu0 0.0
        %415 = vmatpush1.msra.mxu0 0.0
        %416 = vmatprep.subr.mxu0 0.0
        %417 = vmatpush1.msra.mxu0 0.0
        %418 = vmatprep.subr.mxu0 0.0
        %419 = vmatpush1.msra.mxu0 0.0
        %420 = vmatprep.subr.mxu0 0.0
        %421 = vmatpush1.msra.mxu0 0.0
        %422 = vmatprep.subr.mxu0 0.0
        %423 = vmatpush1.msra.mxu0 0.0
        %424 = vmatprep.subr.mxu0 0.0
        %425 = vmatpush1.msra.mxu0 0.0
        %426 = vmatprep.subr.mxu0 0.0
        %427 = vmatpush1.msra.mxu0 0.0
        %428 = vmatprep.subr.mxu0 0.0
        %429 = vmatpush1.msra.mxu0 0.0
        %430 = vmatprep.subr.mxu0 0.0
        %431 = vmatpush1.msra.mxu0 0.0
        %432 = vmatprep.subr.mxu0 0.0
        %433 = vmatpush1.msra.mxu0 0.0
        %434 = vmatprep.mubr.f32.mxu0 0.0
        %435 = vmatmul.mubr.f32.gmra.mrb[0].mxu0 %v365
        %v436 = vpop.f32.mrb[0].mxu0
        %v437 = vadd.f32 0.0, %v436
        %v438 = vpop.f32.mrb[0].mxu0
        %439 = vmatprep.mubr.f32.mxu0 0.0
        %440 = vmatmul.mubr.f32.gmra.mrb[0].mxu0 %v368
        %v441 = vpop.f32.mrb[0].mxu0
        %v442 = vadd.f32 0.0, %v441
        %v443 = vpop.f32.mrb[0].mxu0
        %444 = vdwg.mxu0
        %v445 = vld [vmem:[%s3] sm:$0x1]
        %v447 = vlaneseq
        %v448 = vshrl.u32 %v447, 7
        %v449 = vsub.s32 0, %v448
        %v450 = vrot.slane %v445, %v449
        %v452 = vadd.f32 %v437, %v450
        %v453 = vadd.f32 %v442, %v450
        %454 = vst [vmem:[%s270] sm:$0xff] %v452
        %455 = vst [vmem:[%s270 + $0x8] sm:$0xff] %v453
        %s456 = sand.u32 %s140, 1
        %s457 = scalar_lea.sflag [#allocation4], %s456
        %s458 = sand.u32 %s140, 1
        %s459 = smul.addr %s458, 16
        %s460 = scalar_lea.vmem [#allocation8], %s459
        // Predicated region
        $region49: #{tpu_custom_call.1} parent=35 // pred_check
          %p461 = pneg %p150
        $region50: #{tpu_custom_call.1} parent=35 // pred_check_branch
          %463 = sbr.rel (%p461) target = $region52
        $region51: #{tpu_custom_call.1} parent=35 // pred_region
          %s464 = smul.u32 2, %s27
          %s466 = ssub.s32 256, 256
          %467 = vsyncadd %s457, %s466
          %s468 = smul.addr %s26, 2
          %s469 = sadd.s32 %s464, %s468
          %s470 = smul.addr %s469, 128
          %s471 = scalar_lea.hbm %s4, %s470
          %s472 = sshll.u32 %s460, 4
          %s473 = int_to_ptr.vmem [resolvable:$true] %s472
          %478 = dma.vmem_to_hbm [thread:$0]  %s473, 256, %s471, %s457, 128, 128, 8
        $region52: #{tpu_custom_call.1} parent=35 // pred_fallthru
          _
      $region36: #{tpu_custom_call.1} parent=5 // pred_fallthru
        _
      %p479 = scmp.le.s32.totalorder 2, %s17
      // Predicated region
      $region53: #{tpu_custom_call.1} parent=5 // pred_check
        %p480 = pneg %p479
      $region54: #{tpu_custom_call.1} parent=5 // pred_check_branch
        %482 = sbr.rel (%p480) target = $region56
      $region55: #{tpu_custom_call.1} parent=5 // pred_region
        %s483 = ssub.s32 %s17, 2
        // Predicated region
        $region57: #{tpu_custom_call.1} parent=55 // pred_check
          %p484 = pneg %p156
        $region58: #{tpu_custom_call.1} parent=55 // pred_check_branch
          %486 = sbr.rel (%p484) target = $region60
        $region59: #{tpu_custom_call.1} parent=55 // pred_region
          %s487 = sand.u32 %s141, 1
          %s488 = scalar_lea.sflag [#allocation4], %s487
          %s489 = sand.u32 %s141, 1
          %s490 = smul.addr %s489, 16
          %s491 = scalar_lea.vmem [#allocation8], %s490
          %492 = dma.done %s488, 256
        $region60: #{tpu_custom_call.1} parent=55 // pred_fallthru
          _
      $region56: #{tpu_custom_call.1} parent=5 // pred_fallthru
        _
    $region6: #{tpu_custom_call.1} parent=1 // loop_footer
      %s21 = sadd.s32 1, %s17
    $region7: #{tpu_custom_call.1} parent=1 // loop_footer_branch
      %16 = sbr.rel target = $region3
    $region8: #{tpu_custom_call.1} parent=1 // loop_exit
      _
    %493 = vsyncpa [#allocation3], 1
    %s494 = scalar_lea.sflag [#allocation3], 1
    %495 = vsyncpa %s494, 1
    %496 = vsyncpa [#allocation6], 1
    %497 = vsyncpa [#allocation4], 1
    %s498 = scalar_lea.sflag [#allocation4], 1
    %499 = vsyncpa %s498, 1

// kernel: tpu_custom_call.1
$region0: #{tpu_custom_call.1}
  #allocation0 [shape = 'u32[]', space=smem, size = 0x4, offset = 0x4, fixed_abs, tag = 'smem constant byte address 0x4 - core index']
  #allocation1 [shape = 'u32[144,128]{1,0:T(1,128)}', space=vmem, size = 0x12000, scoped, tag = 'internal scratch']
  %s0 = inlined_call_operand.hbm [shape: f32[2,16,16], index: 0, kind: input, shape index: {}]
  %s1 = inlined_call_operand.hbm [shape: f32[2,16,32], index: 1, kind: input, shape index: {}]
  %s2 = inlined_call_operand.hbm [shape: f32[32,128], index: 2, kind: input, shape index: {}]
  %s3 = inlined_call_operand.vmem [shape: f32[1,128], index: 3, kind: input, shape index: {}]
  %s4 = inlined_call_operand.hbm [shape: f32[2,16,128], index: 4, kind: output, shape index: {}]
  %s5 = sld [smem:[#allocation0]]
  $region61: #{tpu_custom_call.1} parent=0
    _
  %s7 = ssub.s32 1, %s5
  %s8 = scalar_select 0, %s7, %s5
  $region1: #{tpu_custom_call.1} parent=0
    #allocation2 [shape = 'u8[16384]{0}', space=vmem, size = 0x4000, scoped, tag = 'input window, operand 0']
    #allocation3 [shape = 's32[2]{0}', space=sflag, size = 0x8, scoped, tag = 'scoped memory for tpu_custom_call.1']
    #allocation4 [shape = 's32[2]{0}', space=sflag, size = 0x8, scoped, tag = 'scoped memory for tpu_custom_call.1']
    #allocation5 [shape = 'u8[16384]{0}', space=vmem, size = 0x4000, scoped, tag = 'input window, operand 1']
    #allocation6 [shape = 's32[2]{0}', space=sflag, size = 0x8, scoped, tag = 'scoped memory for tpu_custom_call.1']
    #allocation7 [shape = 'u8[16384]{0}', space=vmem, size = 0x4000, scoped, tag = 'input window, operand 2, single buffered']
    #allocation8 [shape = 'u8[16384]{0}', space=vmem, size = 0x4000, scoped, tag = 'output window, operand 0']
    %9 = vsyncpa [#allocation3], 0
    %s10 = scalar_lea.sflag [#allocation3], 1
    %11 = vsyncpa %s10, 0
    %12 = vsyncpa [#allocation6], 0
    %s13 = scalar_lea.sflag [#allocation6], 1
    %14 = vsyncpa %s13, 0
    %15 = vsyncpa [#allocation4], 0
    %s16 = scalar_lea.sflag [#allocation4], 1
    %17 = vsyncpa %s16, 0
    loop: start=0, step=1, limit=4
    $region2: #{tpu_custom_call.1} parent=1 // loop_pre_header
      _
    $region3: #{tpu_custom_call.1} parent=1 // loop_header
      %s19 = sphi 0, %s23
      %p20 = scmp.ge.s32.totalorder %s19, 4
      %s26 = sphi 0, %s38
      %s27 = sphi 0, %s34
      %s28 = sphi 0, %s26
      %s29 = sphi 0, %s27
      %s30 = sphi 0, %s28
      %s31 = sphi 0, %s29
      %s43 = sphi 0, %s45
      %s46 = sphi 0, %s43
      %s47 = sphi 0, %s46
      %s63 = sphi 0, %s47
      %s69 = sphi 0, %s71
      %s72 = sphi 0, %s69
      %s73 = sphi 0, %s72
      %s89 = sphi 0, %s73
      %s93 = sphi 0, %s93
      %s95 = sphi 0, %s93
      %s96 = sphi 0, %s95
      %s110 = sphi 0, %s96
      %s114 = sphi 0, %s114
      %s116 = sphi 0, %s114
      %s117 = sphi 0, %s116
      %s131 = sphi 0, %s117
      %s139 = sphi 0, %s141
      %s142 = sphi 0, %s139
      %s143 = sphi 0, %s142
      %s159 = sphi 0, %s143
    $region4: #{tpu_custom_call.1} parent=1 // loop_header_branch
      %22 = sbr.rel (%p20) target = $region8
    $region5: #{tpu_custom_call.1} parent=1 // loop_body
      %s24 = ssub.s32 %s19, 1
      %s25 = ssub.s32 %s19, 2
      %s32 = sadd.s32 1, %s27
      %p33 = scmp.ge.s32.totalorder %s32, 1
      %s34 = scalar_select %p33, 0, %s32
      %s35 = sadd.s32 1, %s26
      %s36 = scalar_select %p33, %s35, %s26
      %p37 = scmp.ge.s32.totalorder %s36, 2
      %s38 = scalar_select %p37, 0, %s36
      %s39 = ssub.s32 %s26, %s38
      %s40 = ssub.s32 %s27, %s34
      %s41 = sor.u32 %s39, %s40
      %p42 = scmp.eq.s32.totalorder %s41, 0
      %s44 = sadd.s32 %s43, 1
      %s45 = scalar_select %p42, %s43, %s44
      %p48 = pneg %p42
      %p49 = scmp.eq.s32.totalorder %s19, 1
      %p50 = por %p48, %p49
      %p51 = scmp.ne.s32.totalorder %s43, %s46
      %p52 = scmp.eq.s32.totalorder %s19, 0
      %p53 = por %p51, %p52
      %p54 = scmp.ne.s32.totalorder %s43, %s46
      %p55 = scmp.eq.s32.totalorder %s24, 1
      %p56 = por %p54, %p55
      %p57 = scmp.ne.s32.totalorder %s46, %s47
      %p58 = scmp.eq.s32.totalorder %s24, 0
      %p59 = por %p57, %p58
      %p60 = scmp.ne.s32.totalorder %s46, %s47
      %p61 = scmp.eq.s32.totalorder %s25, 1
      %p62 = por %p60, %p61
      %p64 = scmp.ne.s32.totalorder %s47, %s63
      %p65 = scmp.eq.s32.totalorder %s25, 0
      %p66 = por %p64, %p65
      %s67 = ssub.s32 %s26, %s38
      %p68 = scmp.eq.s32.totalorder %s67, 0
      %s70 = sadd.s32 %s69, 1
      %s71 = scalar_select %p68, %s69, %s70
      %p74 = pneg %p68
      %p75 = scmp.eq.s32.totalorder %s19, 1
      %p76 = por %p74, %p75
      %p77 = scmp.ne.s32.totalorder %s69, %s72
      %p78 = scmp.eq.s32.totalorder %s19, 0
      %p79 = por %p77, %p78
      %p80 = scmp.ne.s32.totalorder %s69, %s72
      %p81 = scmp.eq.s32.totalorder %s24, 1
      %p82 = por %p80, %p81
      %p83 = scmp.ne.s32.totalorder %s72, %s73
      %p84 = scmp.eq.s32.totalorder %s24, 0
      %p85 = por %p83, %p84
      %p86 = scmp.ne.s32.totalorder %s72, %s73
      %p87 = scmp.eq.s32.totalorder %s25, 1
      %p88 = por %p86, %p87
      %p90 = scmp.ne.s32.totalorder %s73, %s89
      %p91 = scmp.eq.s32.totalorder %s25, 0
      %p92 = por %p90, %p91
      %s94 = sadd.s32 %s93, 1
      %p97 = scmp.eq.s32.totalorder %s19, 1
      %p98 = scmp.ne.s32.totalorder %s93, %s95
      %p99 = scmp.eq.s32.totalorder %s19, 0
      %p100 = por %p98, %p99
      %p101 = scmp.ne.s32.totalorder %s93, %s95
      %p102 = scmp.eq.s32.totalorder %s24, 1
      %p103 = por %p101, %p102
      %p104 = scmp.ne.s32.totalorder %s95, %s96
      %p105 = scmp.eq.s32.totalorder %s24, 0
      %p106 = por %p104, %p105
      %p107 = scmp.ne.s32.totalorder %s95, %s96
      %p108 = scmp.eq.s32.totalorder %s25, 1
      %p109 = por %p107, %p108
      %p111 = scmp.ne.s32.totalorder %s96, %s110
      %p112 = scmp.eq.s32.totalorder %s25, 0
      %p113 = por %p111, %p112
      %s115 = sadd.s32 %s114, 1
      %p118 = scmp.eq.s32.totalorder %s19, 1
      %p119 = scmp.ne.s32.totalorder %s114, %s116
      %p120 = scmp.eq.s32.totalorder %s19, 0
      %p121 = por %p119, %p120
      %p122 = scmp.ne.s32.totalorder %s114, %s116
      %p123 = scmp.eq.s32.totalorder %s24, 1
      %p124 = por %p122, %p123
      %p125 = scmp.ne.s32.totalorder %s116, %s117
      %p126 = scmp.eq.s32.totalorder %s24, 0
      %p127 = por %p125, %p126
      %p128 = scmp.ne.s32.totalorder %s116, %s117
      %p129 = scmp.eq.s32.totalorder %s25, 1
      %p130 = por %p128, %p129
      %p132 = scmp.ne.s32.totalorder %s117, %s131
      %p133 = scmp.eq.s32.totalorder %s25, 0
      %p134 = por %p132, %p133
      %s135 = ssub.s32 %s26, %s38
      %s136 = ssub.s32 %s27, %s34
      %s137 = sor.u32 %s135, %s136
      %p138 = scmp.eq.s32.totalorder %s137, 0
      %s140 = sadd.s32 %s139, 1
      %s141 = scalar_select %p138, %s139, %s140
      %p144 = pneg %p138
      %p145 = scmp.eq.s32.totalorder %s19, 1
      %p146 = por %p144, %p145
      %p147 = scmp.ne.s32.totalorder %s139, %s142
      %p148 = scmp.eq.s32.totalorder %s19, 0
      %p149 = por %p147, %p148
      %p150 = scmp.ne.s32.totalorder %s139, %s142
      %p151 = scmp.eq.s32.totalorder %s24, 1
      %p152 = por %p150, %p151
      %p153 = scmp.ne.s32.totalorder %s142, %s143
      %p154 = scmp.eq.s32.totalorder %s24, 0
      %p155 = por %p153, %p154
      %p156 = scmp.ne.s32.totalorder %s142, %s143
      %p157 = scmp.eq.s32.totalorder %s25, 1
      %p158 = por %p156, %p157
      %p160 = scmp.ne.s32.totalorder %s143, %s159
      %p161 = scmp.eq.s32.totalorder %s25, 0
      %p162 = por %p160, %p161
      %p163 = scmp.le.s32.totalorder 1, %s19
      %p164 = scmp.lt.s32.totalorder %s19, 3
      %p165 = pnand %p163, %p164
      %p166 = pneg %p165
      // Predicated region
      $region9: #{tpu_custom_call.1} parent=5 // pred_check
        _
      $region10: #{tpu_custom_call.1} parent=5 // pred_check_branch
        %168 = sbr.rel (%p165) target = $region12
      $region11: #{tpu_custom_call.1} parent=5 // pred_region
        %s169 = ssub.s32 %s19, 1
        // Predicated region
        $region13: #{tpu_custom_call.1} parent=11 // pred_check
          %p170 = pneg %p106
        $region14: #{tpu_custom_call.1} parent=11 // pred_check_branch
          %172 = sbr.rel (%p170) target = $region16
        $region15: #{tpu_custom_call.1} parent=11 // pred_region
          %s174 = ssub.s32 512, 512
          %175 = vsyncadd [#allocation6], %s174
          %s176 = sshll.u32 [#allocation7], 4
          %s177 = int_to_ptr.vmem [resolvable:$true] %s176
          %182 = dma.hbm_to_vmem [thread:$0]  %s2, 512, %s177, [#allocation6], 128, 128, 8
        $region16: #{tpu_custom_call.1} parent=11 // pred_fallthru
          _
        // Predicated region
        $region17: #{tpu_custom_call.1} parent=11 // pred_check
          %p183 = pneg %p127
        $region18: #{tpu_custom_call.1} parent=11 // pred_check_branch
          %185 = sbr.rel (%p183) target = $region20
        $region19: #{tpu_custom_call.1} parent=11 // pred_region
          _
        $region20: #{tpu_custom_call.1} parent=11 // pred_fallthru
          _
      $region12: #{tpu_custom_call.1} parent=5 // pred_fallthru
        _
      %p186 = scmp.lt.s32.totalorder %s19, 2
      // Predicated region
      $region21: #{tpu_custom_call.1} parent=5 // pred_check
        %p187 = pneg %p186
      $region22: #{tpu_custom_call.1} parent=5 // pred_check_branch
        %189 = sbr.rel (%p187) target = $region24
      $region23: #{tpu_custom_call.1} parent=5 // pred_region
        // Predicated region
        $region25: #{tpu_custom_call.1} parent=23 // pred_check
          %p190 = pneg %p53
        $region26: #{tpu_custom_call.1} parent=23 // pred_check_branch
          %192 = sbr.rel (%p190) target = $region28
        $region27: #{tpu_custom_call.1} parent=23 // pred_region
          %s193 = sand.u32 %s43, 1
          %s194 = scalar_lea.sflag [#allocation3], %s193
          %s195 = sand.u32 %s43, 1
          %s196 = smul.addr %s195, 16
          %s197 = scalar_lea.vmem [#allocation2], %s196
          %s198 = smul.u32 2, %s27
          %s200 = ssub.s32 256, 256
          %201 = vsyncadd %s194, %s200
          %s202 = smul.addr %s26, 2
          %s203 = sadd.s32 %s198, %s202
          %s204 = smul.addr %s203, 128
          %s205 = scalar_lea.hbm %s0, %s204
          %s206 = sshll.u32 %s197, 4
          %s207 = int_to_ptr.vmem [resolvable:$true] %s206
          %212 = dma.hbm_to_vmem [thread:$0]  %s205, 256, %s207, %s194, 128, 128, 8
        $region28: #{tpu_custom_call.1} parent=23 // pred_fallthru
          _
        // Predicated region
        $region29: #{tpu_custom_call.1} parent=23 // pred_check
          %p213 = pneg %p79
        $region30: #{tpu_custom_call.1} parent=23 // pred_check_branch
          %215 = sbr.rel (%p213) target = $region32
        $region31: #{tpu_custom_call.1} parent=23 // pred_region
          %s216 = sand.u32 %s19, 1
          %s217 = scalar_lea.sflag [#allocation6], %s216
          %s218 = sand.u32 %s69, 1
          %s219 = smul.addr %s218, 16
          %s220 = scalar_lea.vmem [#allocation5], %s219
          %s222 = ssub.s32 256, 256
          %223 = vsyncadd %s217, %s222
          %s224 = smul.addr %s26, 2
          %s225 = smul.addr %s224, 128
          %s226 = scalar_lea.hbm %s1, %s225
          %s227 = sshll.u32 %s220, 4
          %s228 = int_to_ptr.vmem [resolvable:$true] %s227
          %233 = dma.hbm_to_vmem [thread:$0]  %s226, 256, %s228, %s217, 128, 128, 8
        $region32: #{tpu_custom_call.1} parent=23 // pred_fallthru
          _
      $region24: #{tpu_custom_call.1} parent=5 // pred_fallthru
        _
      %p234 = scmp.le.s32.totalorder 1, %s19
      %p235 = scmp.lt.s32.totalorder %s19, 3
      %p236 = pnand %p234, %p235
      %p237 = pneg %p236
      // Predicated region
      $region33: #{tpu_custom_call.1} parent=5 // pred_check
        _
      $region34: #{tpu_custom_call.1} parent=5 // pred_check_branch
        %239 = sbr.rel (%p236) target = $region36
      $region35: #{tpu_custom_call.1} parent=5 // pred_region
        %s240 = ssub.s32 %s19, 1
        %s241 = sand.u32 %s46, 1
        %s242 = scalar_lea.sflag [#allocation3], %s241
        %s243 = sand.u32 %s46, 1
        %s244 = smul.addr %s243, 16
        %s245 = scalar_lea.vmem [#allocation2], %s244
        // Predicated region
        $region37: #{tpu_custom_call.1} parent=35 // pred_check
          %p246 = pneg %p59
        $region38: #{tpu_custom_call.1} parent=35 // pred_check_branch
          %248 = sbr.rel (%p246) target = $region40
        $region39: #{tpu_custom_call.1} parent=35 // pred_region
          %249 = dma.done %s242, 256
        $region40: #{tpu_custom_call.1} parent=35 // pred_fallthru
          _
        %s250 = sand.u32 %s24, 1
        %s251 = scalar_lea.sflag [#allocation6], %s250
        %s252 = sand.u32 %s72, 1
        %s253 = smul.addr %s252, 16
        %s254 = scalar_lea.vmem [#allocation5], %s253
        // Predicated region
        $region41: #{tpu_custom_call.1} parent=35 // pred_check
          %p255 = pneg %p85
        $region42: #{tpu_custom_call.1} parent=35 // pred_check_branch
          %257 = sbr.rel (%p255) target = $region44
        $region43: #{tpu_custom_call.1} parent=35 // pred_region
          %258 = dma.done %s251, 256
        $region44: #{tpu_custom_call.1} parent=35 // pred_fallthru
          _
        // Predicated region
        $region45: #{tpu_custom_call.1} parent=35 // pred_check
          %p259 = pneg %p106
        $region46: #{tpu_custom_call.1} parent=35 // pred_check_branch
          %261 = sbr.rel (%p259) target = $region48
        $region47: #{tpu_custom_call.1} parent=35 // pred_region
          %262 = dma.done [#allocation6], 512
        $region48: #{tpu_custom_call.1} parent=35 // pred_fallthru
          _
        %s263 = sand.u32 %s46, 1
        %s264 = scalar_lea.sflag [#allocation3], %s263
        %s265 = sand.u32 %s46, 1
        %s266 = smul.addr %s265, 16
        %s267 = scalar_lea.vmem [#allocation2], %s266
        %p268 = pneg %p59
        %p269 = pneg %p56
        %s270 = sand.u32 %s24, 1
        %s271 = scalar_lea.sflag [#allocation6], %s270
        %s272 = sand.u32 %s72, 1
        %s273 = smul.addr %s272, 16
        %s274 = scalar_lea.vmem [#allocation5], %s273
        %p275 = pneg %p85
        %p276 = pneg %p82
        %p277 = pneg %p106
        %p278 = pneg %p103
        %p279 = pneg %p127
        %p280 = pneg %p124
        %p281 = pneg %p155
        %p282 = pneg %p152
        %s283 = sand.u32 %s142, 1
        %s284 = scalar_lea.sflag [#allocation4], %s283
        %s285 = sand.u32 %s142, 1
        %s286 = smul.addr %s285, 16
        %s287 = scalar_lea.vmem [#allocation8], %s286
        %s288 = smul.u32 2, %s29
        %s289 = smul.u32 2, %s29
        %v290 = vld [vmem:[%s245] sm:$0xff]
        %v291 = vld [vmem:[%s245 + $0x8] sm:$0xff]
        %v292 = vld [vmem:[%s254] sm:$0xff]
        %v293 = vld [vmem:[%s254 + $0x8] sm:$0xff]
        %v294 = vld [vmem:[#allocation7] sm:$0xff]
        %v295 = vld [vmem:[#allocation7 + $0x8] sm:$0xff]
        %v296 = vld [vmem:[#allocation7 + $0x10] sm:$0xff]
        %v297 = vld [vmem:[#allocation7 + $0x18] sm:$0xff]
        %vm298 = vcmask 130048
        %v300 = vsel %vm298, %v290, 0
        %v303 = vsel %vm298, %v291, 0
        %305 = vmatprep.subr.mxu0 0.0
        %306 = vmatpush1.msra.mxu0 %v292
        %307 = vmatprep.subr.mxu0 0.0
        %308 = vmatpush1.msra.mxu0 %v293
        %309 = vmatprep.subr.mxu0 0.0
        %310 = vmatpush1.msra.mxu0 0.0
        %311 = vmatprep.subr.mxu0 0.0
        %312 = vmatpush1.msra.mxu0 0.0
        %313 = vmatprep.subr.mxu0 0.0
        %314 = vmatpush1.msra.mxu0 0.0
        %315 = vmatprep.subr.mxu0 0.0
        %316 = vmatpush1.msra.mxu0 0.0
        %317 = vmatprep.subr.mxu0 0.0
        %318 = vmatpush1.msra.mxu0 0.0
        %319 = vmatprep.subr.mxu0 0.0
        %320 = vmatpush1.msra.mxu0 0.0
        %321 = vmatprep.subr.mxu0 0.0
        %322 = vmatpush1.msra.mxu0 0.0
        %323 = vmatprep.subr.mxu0 0.0
        %324 = vmatpush1.msra.mxu0 0.0
        %325 = vmatprep.subr.mxu0 0.0
        %326 = vmatpush1.msra.mxu0 0.0
        %327 = vmatprep.subr.mxu0 0.0
        %328 = vmatpush1.msra.mxu0 0.0
        %329 = vmatprep.subr.mxu0 0.0
        %330 = vmatpush1.msra.mxu0 0.0
        %331 = vmatprep.subr.mxu0 0.0
        %332 = vmatpush1.msra.mxu0 0.0
        %333 = vmatprep.subr.mxu0 0.0
        %334 = vmatpush1.msra.mxu0 0.0
        %335 = vmatprep.subr.mxu0 0.0
        %336 = vmatpush1.msra.mxu0 0.0
        %337 = vmatprep.subr.mxu0 0.0
        %338 = vmatpush1.msra.mxu0 0.0
        %339 = vmatprep.subr.mxu0 0.0
        %340 = vmatpush1.msra.mxu0 0.0
        %341 = vmatprep.subr.mxu0 0.0
        %342 = vmatpush1.msra.mxu0 0.0
        %343 = vmatprep.subr.mxu0 0.0
        %344 = vmatpush1.msra.mxu0 0.0
        %345 = vmatprep.subr.mxu0 0.0
        %346 = vmatpush1.msra.mxu0 0.0
        %347 = vmatprep.subr.mxu0 0.0
        %348 = vmatpush1.msra.mxu0 0.0
        %349 = vmatprep.subr.mxu0 0.0
        %350 = vmatpush1.msra.mxu0 0.0
        %351 = vmatprep.subr.mxu0 0.0
        %352 = vmatpush1.msra.mxu0 0.0
        %353 = vmatprep.subr.mxu0 0.0
        %354 = vmatpush1.msra.mxu0 0.0
        %355 = vmatprep.subr.mxu0 0.0
        %356 = vmatpush1.msra.mxu0 0.0
        %357 = vmatprep.subr.mxu0 0.0
        %358 = vmatpush1.msra.mxu0 0.0
        %359 = vmatprep.subr.mxu0 0.0
        %360 = vmatpush1.msra.mxu0 0.0
        %361 = vmatprep.subr.mxu0 0.0
        %362 = vmatpush1.msra.mxu0 0.0
        %363 = vmatprep.subr.mxu0 0.0
        %364 = vmatpush1.msra.mxu0 0.0
        %365 = vmatprep.subr.mxu0 0.0
        %366 = vmatpush1.msra.mxu0 0.0
        %367 = vmatprep.subr.mxu0 0.0
        %368 = vmatpush1.msra.mxu0 0.0
        %369 = vmatprep.mubr.f32.mxu0 0.0
        %370 = vmatmul.mubr.f32.gmra.mrb[0].mxu0 %v300
        %v371 = vpop.f32.mrb[0].mxu0
        %v372 = vadd.f32 0.0, %v371
        %v373 = vpop.f32.mrb[0].mxu0
        %374 = vmatprep.mubr.f32.mxu0 0.0
        %375 = vmatmul.mubr.f32.gmra.mrb[0].mxu0 %v303
        %v376 = vpop.f32.mrb[0].mxu0
        %v377 = vadd.f32 0.0, %v376
        %v378 = vpop.f32.mrb[0].mxu0
        %379 = vdwg.mxu0
        %vm380 = vcmask 261120
        %v382 = vsel %vm380, %v372, 0
        %v385 = vsel %vm380, %v377, 0
        %387 = vmatprep.subr.mxu0 0.0
        %388 = vmatpush1.msra.mxu0 %v294
        %389 = vmatprep.subr.mxu0 0.0
        %390 = vmatpush1.msra.mxu0 %v295
        %391 = vmatprep.subr.mxu0 0.0
        %392 = vmatpush1.msra.mxu0 %v296
        %393 = vmatprep.subr.mxu0 0.0
        %394 = vmatpush1.msra.mxu0 %v297
        %395 = vmatprep.subr.mxu0 0.0
        %396 = vmatpush1.msra.mxu0 0.0
        %397 = vmatprep.subr.mxu0 0.0
        %398 = vmatpush1.msra.mxu0 0.0
        %399 = vmatprep.subr.mxu0 0.0
        %400 = vmatpush1.msra.mxu0 0.0
        %401 = vmatprep.subr.mxu0 0.0
        %402 = vmatpush1.msra.mxu0 0.0
        %403 = vmatprep.subr.mxu0 0.0
        %404 = vmatpush1.msra.mxu0 0.0
        %405 = vmatprep.subr.mxu0 0.0
        %406 = vmatpush1.msra.mxu0 0.0
        %407 = vmatprep.subr.mxu0 0.0
        %408 = vmatpush1.msra.mxu0 0.0
        %409 = vmatprep.subr.mxu0 0.0
        %410 = vmatpush1.msra.mxu0 0.0
        %411 = vmatprep.subr.mxu0 0.0
        %412 = vmatpush1.msra.mxu0 0.0
        %413 = vmatprep.subr.mxu0 0.0
        %414 = vmatpush1.msra.mxu0 0.0
        %415 = vmatprep.subr.mxu0 0.0
        %416 = vmatpush1.msra.mxu0 0.0
        %417 = vmatprep.subr.mxu0 0.0
        %418 = vmatpush1.msra.mxu0 0.0
        %419 = vmatprep.subr.mxu0 0.0
        %420 = vmatpush1.msra.mxu0 0.0
        %421 = vmatprep.subr.mxu0 0.0
        %422 = vmatpush1.msra.mxu0 0.0
        %423 = vmatprep.subr.mxu0 0.0
        %424 = vmatpush1.msra.mxu0 0.0
        %425 = vmatprep.subr.mxu0 0.0
        %426 = vmatpush1.msra.mxu0 0.0
        %427 = vmatprep.subr.mxu0 0.0
        %428 = vmatpush1.msra.mxu0 0.0
        %429 = vmatprep.subr.mxu0 0.0
        %430 = vmatpush1.msra.mxu0 0.0
        %431 = vmatprep.subr.mxu0 0.0
        %432 = vmatpush1.msra.mxu0 0.0
        %433 = vmatprep.subr.mxu0 0.0
        %434 = vmatpush1.msra.mxu0 0.0
        %435 = vmatprep.subr.mxu0 0.0
        %436 = vmatpush1.msra.mxu0 0.0
        %437 = vmatprep.subr.mxu0 0.0
        %438 = vmatpush1.msra.mxu0 0.0
        %439 = vmatprep.subr.mxu0 0.0
        %440 = vmatpush1.msra.mxu0 0.0
        %441 = vmatprep.subr.mxu0 0.0
        %442 = vmatpush1.msra.mxu0 0.0
        %443 = vmatprep.subr.mxu0 0.0
        %444 = vmatpush1.msra.mxu0 0.0
        %445 = vmatprep.subr.mxu0 0.0
        %446 = vmatpush1.msra.mxu0 0.0
        %447 = vmatprep.subr.mxu0 0.0
        %448 = vmatpush1.msra.mxu0 0.0
        %449 = vmatprep.subr.mxu0 0.0
        %450 = vmatpush1.msra.mxu0 0.0
        %451 = vmatprep.mubr.f32.mxu0 0.0
        %452 = vmatmul.mubr.f32.gmra.mrb[0].mxu0 %v382
        %v453 = vpop.f32.mrb[0].mxu0
        %v454 = vadd.f32 0.0, %v453
        %v455 = vpop.f32.mrb[0].mxu0
        %456 = vmatprep.mubr.f32.mxu0 0.0
        %457 = vmatmul.mubr.f32.gmra.mrb[0].mxu0 %v385
        %v458 = vpop.f32.mrb[0].mxu0
        %v459 = vadd.f32 0.0, %v458
        %v460 = vpop.f32.mrb[0].mxu0
        %461 = vdwg.mxu0
        %v462 = vld [vmem:[%s3] sm:$0x1]
        %v464 = vlaneseq
        %v465 = vshrl.u32 %v464, 7
        %v466 = vsub.s32 0, %v465
        %v467 = vrot.slane %v462, %v466
        %v469 = vadd.f32 %v454, %v467
        %v470 = vadd.f32 %v459, %v467
        %471 = vst [vmem:[%s287] sm:$0xff] %v469
        %472 = vst [vmem:[%s287 + $0x8] sm:$0xff] %v470
        %s473 = sand.u32 %s142, 1
        %s474 = scalar_lea.sflag [#allocation4], %s473
        %s475 = sand.u32 %s142, 1
        %s476 = smul.addr %s475, 16
        %s477 = scalar_lea.vmem [#allocation8], %s476
        // Predicated region
        $region49: #{tpu_custom_call.1} parent=35 // pred_check
          %p478 = pneg %p152
        $region50: #{tpu_custom_call.1} parent=35 // pred_check_branch
          %480 = sbr.rel (%p478) target = $region52
        $region51: #{tpu_custom_call.1} parent=35 // pred_region
          %s481 = smul.u32 2, %s29
          %s483 = ssub.s32 256, 256
          %484 = vsyncadd %s474, %s483
          %s485 = smul.addr %s28, 2
          %s486 = sadd.s32 %s481, %s485
          %s487 = smul.addr %s486, 128
          %s488 = scalar_lea.hbm %s4, %s487
          %s489 = sshll.u32 %s477, 4
          %s490 = int_to_ptr.vmem [resolvable:$true] %s489
          %495 = dma.vmem_to_hbm [thread:$0]  %s490, 256, %s488, %s474, 128, 128, 8
        $region52: #{tpu_custom_call.1} parent=35 // pred_fallthru
          _
      $region36: #{tpu_custom_call.1} parent=5 // pred_fallthru
        _
      %p496 = scmp.le.s32.totalorder 2, %s19
      // Predicated region
      $region53: #{tpu_custom_call.1} parent=5 // pred_check
        %p497 = pneg %p496
      $region54: #{tpu_custom_call.1} parent=5 // pred_check_branch
        %499 = sbr.rel (%p497) target = $region56
      $region55: #{tpu_custom_call.1} parent=5 // pred_region
        %s500 = ssub.s32 %s19, 2
        // Predicated region
        $region57: #{tpu_custom_call.1} parent=55 // pred_check
          %p501 = pneg %p158
        $region58: #{tpu_custom_call.1} parent=55 // pred_check_branch
          %503 = sbr.rel (%p501) target = $region60
        $region59: #{tpu_custom_call.1} parent=55 // pred_region
          %s504 = sand.u32 %s143, 1
          %s505 = scalar_lea.sflag [#allocation4], %s504
          %s506 = sand.u32 %s143, 1
          %s507 = smul.addr %s506, 16
          %s508 = scalar_lea.vmem [#allocation8], %s507
          %509 = dma.done %s505, 256
        $region60: #{tpu_custom_call.1} parent=55 // pred_fallthru
          _
      $region56: #{tpu_custom_call.1} parent=5 // pred_fallthru
        _
    $region6: #{tpu_custom_call.1} parent=1 // loop_footer
      %s23 = sadd.s32 1, %s19
    $region7: #{tpu_custom_call.1} parent=1 // loop_footer_branch
      %18 = sbr.rel target = $region3
    $region8: #{tpu_custom_call.1} parent=1 // loop_exit
      _
    %510 = vsyncpa [#allocation3], 1
    %s511 = scalar_lea.sflag [#allocation3], 1
    %512 = vsyncpa %s511, 1
    %513 = vsyncpa [#allocation6], 1
    %s514 = scalar_lea.sflag [#allocation6], 1
    %515 = vsyncpa %s514, 1
    %516 = vsyncpa [#allocation4], 1
    %s517 = scalar_lea.sflag [#allocation4], 1
    %518 = vsyncpa %s517, 1

</llo_original>
